<compile_context>
chip_gen: v6e
topology: v6e:2x2x1
jax: 0.10.0
libtpu: 0.0.40
codegen_flags: <defaults>
</compile_context>

<pallas_src>
import jax
import jax.numpy as jnp
from jax.experimental import pallas as pl
from jax.experimental.pallas import tpu as pltpu


def _round_up(x, m):
    return ((x + m - 1) // m) * m


def _make_kernel(dim, two_dim, mxu_dtype, approx_silu):
    def _silu(v):
        if approx_silu:
            # reciprocal(approx=True) lands on the EUP slot alongside exp.
            return v * pl.reciprocal(1.0 + jnp.exp(-v), approx=True)
        return v * jax.nn.sigmoid(v)

    def kernel(t_ref, emb2_ref, w1_ref, b1_ref, w2_ref, b2_ref, out_ref):
        # t_ref:    (TILE_N, 1)      diffusion steps for this row tile (f32)
        # emb2_ref: (1, 2*dim)       [emb, emb]                        (f32)
        # w1_ref:   (2*dim, P_pad)   W1^T                      (bf16 or f32)
        # b1_ref:   (1, P_pad)                                         (f32)
        # w2_ref:   (P_pad, P_pad)   W2^T                      (bf16 or f32)
        # b2_ref:   (1, P_pad)                                         (f32)
        # out_ref:  (TILE_N, P_pad)
        t = t_ref[...]                                        # (TILE_N, 1)
        x2 = t * emb2_ref[...]                                # (TILE_N, 2*dim)

        # cat([sin(x), cos(x)]) built as one full-width slab: lanes < dim get
        # sin, lanes >= dim get cos.  Exact cos (no phase trick), no cross-lane
        # concatenation.
        col = jax.lax.broadcasted_iota(jnp.int32, (1, two_dim), 1)
        feats = jnp.where(col < dim, jnp.sin(x2), jnp.cos(x2))   # f32

        # projection1: single fused K=2*dim MXU matmul, f32 accumulation.
        h = jnp.dot(feats.astype(mxu_dtype), w1_ref[...],
                    preferred_element_type=jnp.float32) + b1_ref[...]
        h = _silu(h)

        # projection2.
        o = jnp.dot(h.astype(mxu_dtype), w2_ref[...],
                    preferred_element_type=jnp.float32) + b2_ref[...]
        o = _silu(o)

        out_ref[...] = o.astype(out_ref.dtype)

    return kernel


def cont_diffusion_embedding(diffusion_step, emb, w1, b1, w2, b2, *,
                             tile_n=512, use_bf16=True, out_dtype=jnp.float32):
    """diffusion_step: (B, L, 1) f32.  emb: (1,1,dim).  w1: (P, 2*dim), w2: (P, P)."""
    B, L, _ = diffusion_step.shape
    proj_dim, two_dim = w1.shape
    dim = two_dim // 2
    N = B * L

    # --- row tiling / tail padding (tile_n forced to a multiple of 8) --------
    tile_n = max(8, min(int(tile_n), _round_up(N, 8)))
    tile_n = _round_up(tile_n, 8)
    n_pad = _round_up(N, tile_n)
    grid = (n_pad // tile_n,)

    t2d = diffusion_step.reshape(N, 1).astype(jnp.float32)
    if n_pad != N:
        t2d = jnp.pad(t2d, ((0, n_pad - N), (0, 0)))      # pad rows sliced off below

    # --- parameter prep (done once in the wrapper) ----------------------------
    p_pad = _round_up(proj_dim, 128)                       # lane-dense output stores
    mxu_dtype = jnp.bfloat16 if use_bf16 else jnp.float32

    emb_flat = emb.reshape(dim).astype(jnp.float32)
    emb2 = jnp.concatenate([emb_flat, emb_flat]).reshape(1, two_dim)

    # PyTorch Linear is x @ W.T + b; pre-transpose once, zero-pad columns to P_pad.
    w1t = w1.T.astype(jnp.float32)                         # (2*dim, P)
    w2t = w2.T.astype(jnp.float32)                         # (P, P)
    b1_2d = b1.reshape(1, proj_dim).astype(jnp.float32)
    b2_2d = b2.reshape(1, proj_dim).astype(jnp.float32)
    if p_pad != proj_dim:
        pc = p_pad - proj_dim
        w1t = jnp.pad(w1t, ((0, 0), (0, pc)))
        w2t = jnp.pad(w2t, ((0, pc), (0, pc)))
        b1_2d = jnp.pad(b1_2d, ((0, 0), (0, pc)))
        b2_2d = jnp.pad(b2_2d, ((0, 0), (0, pc)))
    w1t = w1t.astype(mxu_dtype)                            # bf16 MXU operands
    w2t = w2t.astype(mxu_dtype)

    kernel = _make_kernel(dim, two_dim, mxu_dtype, approx_silu=use_bf16)

    # --- cost estimate + explicit VMEM budget ---------------------------------
    w_isz = jnp.dtype(mxu_dtype).itemsize
    o_isz = jnp.dtype(out_dtype).itemsize
    flops = 2 * n_pad * (two_dim * p_pad + p_pad * p_pad)
    transcendentals = n_pad * (two_dim + 2 * p_pad)
    bytes_accessed = (n_pad * 4 + n_pad * p_pad * o_isz
                      + (two_dim * p_pad + p_pad * p_pad) * w_isz
                      + (2 * p_pad + two_dim) * 4)
    cost = pl.CostEstimate(flops=int(flops),
                           transcendentals=int(transcendentals),
                           bytes_accessed=int(bytes_accessed))

    weight_bytes = (two_dim * p_pad + p_pad * p_pad) * w_isz + (2 * p_pad + two_dim) * 4
    io_bytes = 2 * tile_n * 4 + 2 * tile_n * p_pad * o_isz       # double-buffered t + out
    scratch_bytes = 6 * tile_n * max(p_pad, two_dim) * 4          # feats / h / o headroom
    vmem_limit = int(min(64 * 1024 * 1024,
                         max(32 * 1024 * 1024,
                             2 * weight_bytes + io_bytes + scratch_bytes + (1 << 20))))

    out_shape = jax.ShapeDtypeStruct((n_pad, p_pad), out_dtype)

    def build(fancy):
        if fancy:
            # Single-buffer the grid-constant operands (weights resident once in
            # VMEM — critical on v7x's 64 MiB) and split the independent row
            # axis across TensorCores.
            pinned = lambda block: pl.BlockSpec(block, lambda i: (0, 0),
                                                pipeline_mode=pl.Buffered(1))
            sem = (pltpu.CORE_PARALLEL,)
        else:
            pinned = lambda block: pl.BlockSpec(block, lambda i: (0, 0))
            sem = ("parallel",)
        return pl.pallas_call(
            kernel,
            out_shape=out_shape,
            grid=grid,
            in_specs=[
                pl.BlockSpec((tile_n, 1), lambda i: (i, 0)),   # t rows (pipelined)
                pinned((1, two_dim)),                          # [emb, emb]
                pinned((two_dim, p_pad)),                      # W1^T
                pinned((1, p_pad)),                            # b1
                pinned((p_pad, p_pad)),                        # W2^T
                pinned((1, p_pad)),                            # b2
            ],
            out_specs=pl.BlockSpec((tile_n, p_pad), lambda i: (i, 0)),
            compiler_params=pltpu.CompilerParams(
                dimension_semantics=sem,
                vmem_limit_bytes=vmem_limit),
            cost_estimate=cost,
        )

    args = (t2d, emb2, w1t, b1_2d, w2t, b2_2d)
    try:
        out = build(fancy=True)(*args)
    except Exception:
        # Fallback for JAX/Mosaic versions (or chips) that reject Buffered(1)
        # single-buffering or CORE_PARALLEL: plain double-buffered build.
        out = build(fancy=False)(*args)

    return out[:N, :proj_dim].reshape(B, L, proj_dim)


def _build_embedding(dim):
    dims = jnp.arange(dim, dtype=jnp.float32)
    return (10.0 ** (dims * 4.0 / dim)).reshape(1, 1, dim)


def _reference(diffusion_step, emb, w1, b1, w2, b2):
    x = diffusion_step * emb                                   # (B, L, dim)
    x = jnp.concatenate([jnp.sin(x), jnp.cos(x)], axis=2)      # (B, L, 2*dim)
    x = x @ w1.T + b1
    x = x * jax.nn.sigmoid(x)
    x = x @ w2.T + b2
    x = x * jax.nn.sigmoid(x)
    return x


if __name__ == "__main__":
    dim, proj_dim = 16, 32

    key = jax.random.PRNGKey(0)
    k_t, k_w1, k_b1, k_w2, k_b2 = jax.random.split(key, 5)

    # deterministic synthetic parameters (PyTorch-style uniform bounds)
    bound1 = 1.0 / jnp.sqrt(2.0 * dim)
    bound2 = 1.0 / jnp.sqrt(1.0 * proj_dim)
    w1 = jax.random.uniform(k_w1, (proj_dim, 2 * dim), jnp.float32, -bound1, bound1)
    b1 = jax.random.uniform(k_b1, (proj_dim,), jnp.float32, -bound1, bound1)
    w2 = jax.random.uniform(k_w2, (proj_dim, proj_dim), jnp.float32, -bound2, bound2)
    b2 = jax.random.uniform(k_b2, (proj_dim,), jnp.float32, -bound2, bound2)

    emb = _build_embedding(dim)                                # (1, 1, dim)

    # Configs exercise: single tile, multi-tile grid + tail padding, default tile.
    for B, L, tn in [(2, 8, 8), (3, 7, 8), (4, 16, 512)]:
        kt = jax.random.fold_in(k_t, B * 100 + L)
        diffusion_step = jax.random.uniform(kt, (B, L, 1), jnp.float32)
        ref = _reference(diffusion_step, emb, w1, b1, w2, b2)

        # Fast path: bf16 MXU operands + approx-SiLU (production setting).
        out_fast = cont_diffusion_embedding(diffusion_step, emb, w1, b1, w2, b2,
                                            tile_n=tn, use_bf16=True)
        out_fast = jax.block_until_ready(out_fast)
        assert out_fast.shape == (B, L, proj_dim)
        err_fast = float(jnp.max(jnp.abs(out_fast - ref)))
        assert jnp.allclose(out_fast, ref, atol=5e-2, rtol=5e-2), err_fast

        # Precise path: f32 MXU operands + exact sigmoid, matches f32 ref @ 1e-4.
        out_prec = cont_diffusion_embedding(diffusion_step, emb, w1, b1, w2, b2,
                                            tile_n=tn, use_bf16=False)
        out_prec = jax.block_until_ready(out_prec)
        assert out_prec.shape == (B, L, proj_dim)
        err_prec = float(jnp.max(jnp.abs(out_prec - ref)))
        assert jnp.allclose(out_prec, ref, atol=1e-4, rtol=1e-4), err_prec

    print("KERNEL_OK")
</pallas_src>

<mosaic_0001>
module attributes {stable_mosaic.version = 11 : i64} {
  func.func @kernel(%arg0: i32, %arg1: memref<8x1xf32, #tpu.memory_space<vmem>>, %arg2: memref<1x32xf32, #tpu.memory_space<vmem>>, %arg3: memref<32x128xbf16, #tpu.memory_space<vmem>>, %arg4: memref<1x128xf32, #tpu.memory_space<vmem>>, %arg5: memref<128x128xbf16, #tpu.memory_space<vmem>>, %arg6: memref<1x128xf32, #tpu.memory_space<vmem>>, %arg7: memref<8x128xf32, #tpu.memory_space<vmem>>) attributes {dimension_semantics = [#tpu.dimension_semantics<core_parallel>], iteration_bounds = array<i64: 2>, scalar_prefetch = 0 : i64, scratch_operands = 0 : i64, tpu.core_type = #tpu.core_type<tc>, window_params = [{transform_indices = @transform_0, window_bounds = array<i64: 8, 1>}, {pipeline_mode = #tpu.pipeline_mode<synchronous>, transform_indices = @transform_1, window_bounds = array<i64: 1, 32>}, {pipeline_mode = #tpu.pipeline_mode<synchronous>, transform_indices = @transform_2, window_bounds = array<i64: 32, 128>}, {pipeline_mode = #tpu.pipeline_mode<synchronous>, transform_indices = @transform_3, window_bounds = array<i64: 1, 128>}, {pipeline_mode = #tpu.pipeline_mode<synchronous>, transform_indices = @transform_4, window_bounds = array<i64: 128, 128>}, {pipeline_mode = #tpu.pipeline_mode<synchronous>, transform_indices = @transform_5, window_bounds = array<i64: 1, 128>}, {transform_indices = @transform_6, window_bounds = array<i64: 8, 128>}]} {
    %c0 = arith.constant 0 : index
    %c0_0 = arith.constant 0 : index
    %0 = vector.load %arg1[%c0, %c0_0] : memref<8x1xf32, #tpu.memory_space<vmem>>, vector<8x1xf32>
    %c0_1 = arith.constant 0 : index
    %c0_2 = arith.constant 0 : index
    %1 = vector.load %arg2[%c0_1, %c0_2] : memref<1x32xf32, #tpu.memory_space<vmem>>, vector<1x32xf32>
    %2 = vector.broadcast %0 : vector<8x1xf32> to vector<8x32xf32>
    %3 = vector.broadcast %1 : vector<1x32xf32> to vector<8x32xf32>
    %4 = arith.mulf %2, %3 : vector<8x32xf32>
    %5 = tpu.iota {dimensions = array<i32: 1>} : vector<1x32xi32>
    %c16_i32 = arith.constant 16 : i32
    %6 = vector.broadcast %c16_i32 : i32 to vector<1x32xi32>
    %7 = arith.cmpi slt, %5, %6 : vector<1x32xi32>
    %8 = math.sin %4 : vector<8x32xf32>
    %9 = math.cos %4 : vector<8x32xf32>
    %10 = vector.shape_cast %7 : vector<1x32xi1> to vector<1x32xi1>
    %11 = vector.broadcast %10 : vector<1x32xi1> to vector<8x32xi1>
    %12 = arith.select %11, %8, %9 : vector<8x32xi1>, vector<8x32xf32>
    %13 = arith.truncf %12 : vector<8x32xf32> to vector<8x32xbf16>
    %c0_3 = arith.constant 0 : index
    %c0_4 = arith.constant 0 : index
    %14 = vector.load %arg3[%c0_3, %c0_4] : memref<32x128xbf16, #tpu.memory_space<vmem>>, vector<32x128xbf16>
    %cst = arith.constant dense<0.000000e+00> : vector<8x128xf32>
    %15 = tpu.matmul %13, %14, %cst {dimension_numbers = #tpu.dot_dimension_numbers<[1], [0], [0], [1], [0, 0, 1, 1], [], []>} : vector<8x32xbf16>, vector<32x128xbf16>, vector<8x128xf32> -> vector<8x128xf32>
    %c0_5 = arith.constant 0 : index
    %c0_6 = arith.constant 0 : index
    %16 = vector.load %arg4[%c0_5, %c0_6] : memref<1x128xf32, #tpu.memory_space<vmem>>, vector<1x128xf32>
    %17 = vector.broadcast %16 : vector<1x128xf32> to vector<8x128xf32>
    %18 = arith.addf %15, %17 : vector<8x128xf32>
    %cst_7 = arith.constant 0.000000e+00 : f32
    %19 = vector.broadcast %cst_7 : f32 to vector<8x128xf32>
    %20 = arith.subf %19, %18 : vector<8x128xf32>
    %21 = math.exp %20 : vector<8x128xf32>
    %cst_8 = arith.constant 1.000000e+00 : f32
    %22 = vector.broadcast %cst_8 : f32 to vector<8x128xf32>
    %23 = arith.addf %22, %21 : vector<8x128xf32>
    %24 = tpu.reciprocal %23 {approx = true} : vector<8x128xf32> -> vector<8x128xf32>
    %25 = arith.mulf %18, %24 : vector<8x128xf32>
    %26 = arith.truncf %25 : vector<8x128xf32> to vector<8x128xbf16>
    %c0_9 = arith.constant 0 : index
    %c0_10 = arith.constant 0 : index
    %27 = vector.load %arg5[%c0_9, %c0_10] : memref<128x128xbf16, #tpu.memory_space<vmem>>, vector<128x128xbf16>
    %cst_11 = arith.constant dense<0.000000e+00> : vector<8x128xf32>
    %28 = tpu.matmul %26, %27, %cst_11 {dimension_numbers = #tpu.dot_dimension_numbers<[1], [0], [0], [1], [0, 0, 1, 1], [], []>} : vector<8x128xbf16>, vector<128x128xbf16>, vector<8x128xf32> -> vector<8x128xf32>
    %c0_12 = arith.constant 0 : index
    %c0_13 = arith.constant 0 : index
    %29 = vector.load %arg6[%c0_12, %c0_13] : memref<1x128xf32, #tpu.memory_space<vmem>>, vector<1x128xf32>
    %30 = vector.broadcast %29 : vector<1x128xf32> to vector<8x128xf32>
    %31 = arith.addf %28, %30 : vector<8x128xf32>
    %cst_14 = arith.constant 0.000000e+00 : f32
    %32 = vector.broadcast %cst_14 : f32 to vector<8x128xf32>
    %33 = arith.subf %32, %31 : vector<8x128xf32>
    %34 = math.exp %33 : vector<8x128xf32>
    %cst_15 = arith.constant 1.000000e+00 : f32
    %35 = vector.broadcast %cst_15 : f32 to vector<8x128xf32>
    %36 = arith.addf %35, %34 : vector<8x128xf32>
    %37 = tpu.reciprocal %36 {approx = true} : vector<8x128xf32> -> vector<8x128xf32>
    %38 = arith.mulf %31, %37 : vector<8x128xf32>
    %c0_16 = arith.constant 0 : index
    %c0_17 = arith.constant 0 : index
    %39 = vector.load %arg7[%c0_16, %c0_17] : memref<8x128xf32, #tpu.memory_space<vmem>>, vector<8x128xf32>
    tpu.vector_store %arg7[%c0_16, %c0_17], %38 {strides = array<i32>} : memref<8x128xf32, #tpu.memory_space<vmem>>, vector<8x128xf32>,
    return
  }
  func.func @transform_0(%arg0: i32) -> (i32, i32) {
    %c0_i32 = arith.constant 0 : i32
    %c0_i32_0 = arith.constant 0 : i32
    return %arg0, %c0_i32 : i32, i32
  }
  func.func @transform_1(%arg0: i32) -> (i32, i32) {
    %c0_i32 = arith.constant 0 : i32
    %c0_i32_0 = arith.constant 0 : i32
    %c0_i32_1 = arith.constant 0 : i32
    return %c0_i32, %c0_i32_0 : i32, i32
  }
  func.func @transform_2(%arg0: i32) -> (i32, i32) {
    %c0_i32 = arith.constant 0 : i32
    %c0_i32_0 = arith.constant 0 : i32
    %c0_i32_1 = arith.constant 0 : i32
    return %c0_i32, %c0_i32_0 : i32, i32
  }
  func.func @transform_3(%arg0: i32) -> (i32, i32) {
    %c0_i32 = arith.constant 0 : i32
    %c0_i32_0 = arith.constant 0 : i32
    %c0_i32_1 = arith.constant 0 : i32
    return %c0_i32, %c0_i32_0 : i32, i32
  }
  func.func @transform_4(%arg0: i32) -> (i32, i32) {
    %c0_i32 = arith.constant 0 : i32
    %c0_i32_0 = arith.constant 0 : i32
    %c0_i32_1 = arith.constant 0 : i32
    return %c0_i32, %c0_i32_0 : i32, i32
  }
  func.func @transform_5(%arg0: i32) -> (i32, i32) {
    %c0_i32 = arith.constant 0 : i32
    %c0_i32_0 = arith.constant 0 : i32
    %c0_i32_1 = arith.constant 0 : i32
    return %c0_i32, %c0_i32_0 : i32, i32
  }
  func.func @transform_6(%arg0: i32) -> (i32, i32) {
    %c0_i32 = arith.constant 0 : i32
    %c0_i32_0 = arith.constant 0 : i32
    return %arg0, %c0_i32 : i32, i32
  }
}

module attributes {stable_mosaic.version = 11 : i64} {
  func.func @kernel(%arg0: i32, %arg1: memref<8x1xf32, #tpu.memory_space<vmem>>, %arg2: memref<1x32xf32, #tpu.memory_space<vmem>>, %arg3: memref<32x128xbf16, #tpu.memory_space<vmem>>, %arg4: memref<1x128xf32, #tpu.memory_space<vmem>>, %arg5: memref<128x128xbf16, #tpu.memory_space<vmem>>, %arg6: memref<1x128xf32, #tpu.memory_space<vmem>>, %arg7: memref<8x128xf32, #tpu.memory_space<vmem>>) attributes {dimension_semantics = [#tpu.dimension_semantics<parallel>], iteration_bounds = array<i64: 2>, scalar_prefetch = 0 : i64, scratch_operands = 0 : i64, tpu.core_type = #tpu.core_type<tc>, window_params = [{transform_indices = @transform_0, window_bounds = array<i64: 8, 1>}, {pipeline_mode = #tpu.pipeline_mode<synchronous>, transform_indices = @transform_1, window_bounds = array<i64: 1, 32>}, {pipeline_mode = #tpu.pipeline_mode<synchronous>, transform_indices = @transform_2, window_bounds = array<i64: 32, 128>}, {pipeline_mode = #tpu.pipeline_mode<synchronous>, transform_indices = @transform_3, window_bounds = array<i64: 1, 128>}, {pipeline_mode = #tpu.pipeline_mode<synchronous>, transform_indices = @transform_4, window_bounds = array<i64: 128, 128>}, {pipeline_mode = #tpu.pipeline_mode<synchronous>, transform_indices = @transform_5, window_bounds = array<i64: 1, 128>}, {transform_indices = @transform_6, window_bounds = array<i64: 8, 128>}]} {
    %c0 = arith.constant 0 : index
    %c0_0 = arith.constant 0 : index
    %0 = vector.load %arg1[%c0, %c0_0] : memref<8x1xf32, #tpu.memory_space<vmem>>, vector<8x1xf32>
    %c0_1 = arith.constant 0 : index
    %c0_2 = arith.constant 0 : index
    %1 = vector.load %arg2[%c0_1, %c0_2] : memref<1x32xf32, #tpu.memory_space<vmem>>, vector<1x32xf32>
    %2 = vector.broadcast %0 : vector<8x1xf32> to vector<8x32xf32>
    %3 = vector.broadcast %1 : vector<1x32xf32> to vector<8x32xf32>
    %4 = arith.mulf %2, %3 : vector<8x32xf32>
    %5 = tpu.iota {dimensions = array<i32: 1>} : vector<1x32xi32>
    %c16_i32 = arith.constant 16 : i32
    %6 = vector.broadcast %c16_i32 : i32 to vector<1x32xi32>
    %7 = arith.cmpi slt, %5, %6 : vector<1x32xi32>
    %8 = math.sin %4 : vector<8x32xf32>
    %9 = math.cos %4 : vector<8x32xf32>
    %10 = vector.shape_cast %7 : vector<1x32xi1> to vector<1x32xi1>
    %11 = vector.broadcast %10 : vector<1x32xi1> to vector<8x32xi1>
    %12 = arith.select %11, %8, %9 : vector<8x32xi1>, vector<8x32xf32>
    %13 = arith.truncf %12 : vector<8x32xf32> to vector<8x32xbf16>
    %c0_3 = arith.constant 0 : index
    %c0_4 = arith.constant 0 : index
    %14 = vector.load %arg3[%c0_3, %c0_4] : memref<32x128xbf16, #tpu.memory_space<vmem>>, vector<32x128xbf16>
    %cst = arith.constant dense<0.000000e+00> : vector<8x128xf32>
    %15 = tpu.matmul %13, %14, %cst {dimension_numbers = #tpu.dot_dimension_numbers<[1], [0], [0], [1], [0, 0, 1, 1], [], []>} : vector<8x32xbf16>, vector<32x128xbf16>, vector<8x128xf32> -> vector<8x128xf32>
    %c0_5 = arith.constant 0 : index
    %c0_6 = arith.constant 0 : index
    %16 = vector.load %arg4[%c0_5, %c0_6] : memref<1x128xf32, #tpu.memory_space<vmem>>, vector<1x128xf32>
    %17 = vector.broadcast %16 : vector<1x128xf32> to vector<8x128xf32>
    %18 = arith.addf %15, %17 : vector<8x128xf32>
    %cst_7 = arith.constant 0.000000e+00 : f32
    %19 = vector.broadcast %cst_7 : f32 to vector<8x128xf32>
    %20 = arith.subf %19, %18 : vector<8x128xf32>
    %21 = math.exp %20 : vector<8x128xf32>
    %cst_8 = arith.constant 1.000000e+00 : f32
    %22 = vector.broadcast %cst_8 : f32 to vector<8x128xf32>
    %23 = arith.addf %22, %21 : vector<8x128xf32>
    %24 = tpu.reciprocal %23 {approx = true} : vector<8x128xf32> -> vector<8x128xf32>
    %25 = arith.mulf %18, %24 : vector<8x128xf32>
    %26 = arith.truncf %25 : vector<8x128xf32> to vector<8x128xbf16>
    %c0_9 = arith.constant 0 : index
    %c0_10 = arith.constant 0 : index
    %27 = vector.load %arg5[%c0_9, %c0_10] : memref<128x128xbf16, #tpu.memory_space<vmem>>, vector<128x128xbf16>
    %cst_11 = arith.constant dense<0.000000e+00> : vector<8x128xf32>
    %28 = tpu.matmul %26, %27, %cst_11 {dimension_numbers = #tpu.dot_dimension_numbers<[1], [0], [0], [1], [0, 0, 1, 1], [], []>} : vector<8x128xbf16>, vector<128x128xbf16>, vector<8x128xf32> -> vector<8x128xf32>
    %c0_12 = arith.constant 0 : index
    %c0_13 = arith.constant 0 : index
    %29 = vector.load %arg6[%c0_12, %c0_13] : memref<1x128xf32, #tpu.memory_space<vmem>>, vector<1x128xf32>
    %30 = vector.broadcast %29 : vector<1x128xf32> to vector<8x128xf32>
    %31 = arith.addf %28, %30 : vector<8x128xf32>
    %cst_14 = arith.constant 0.000000e+00 : f32
    %32 = vector.broadcast %cst_14 : f32 to vector<8x128xf32>
    %33 = arith.subf %32, %31 : vector<8x128xf32>
    %34 = math.exp %33 : vector<8x128xf32>
    %cst_15 = arith.constant 1.000000e+00 : f32
    %35 = vector.broadcast %cst_15 : f32 to vector<8x128xf32>
    %36 = arith.addf %35, %34 : vector<8x128xf32>
    %37 = tpu.reciprocal %36 {approx = true} : vector<8x128xf32> -> vector<8x128xf32>
    %38 = arith.mulf %31, %37 : vector<8x128xf32>
    %c0_16 = arith.constant 0 : index
    %c0_17 = arith.constant 0 : index
    %39 = vector.load %arg7[%c0_16, %c0_17] : memref<8x128xf32, #tpu.memory_space<vmem>>, vector<8x128xf32>
    tpu.vector_store %arg7[%c0_16, %c0_17], %38 {strides = array<i32>} : memref<8x128xf32, #tpu.memory_space<vmem>>, vector<8x128xf32>,
    return
  }
  func.func @transform_0(%arg0: i32) -> (i32, i32) {
    %c0_i32 = arith.constant 0 : i32
    %c0_i32_0 = arith.constant 0 : i32
    return %arg0, %c0_i32 : i32, i32
  }
  func.func @transform_1(%arg0: i32) -> (i32, i32) {
    %c0_i32 = arith.constant 0 : i32
    %c0_i32_0 = arith.constant 0 : i32
    %c0_i32_1 = arith.constant 0 : i32
    return %c0_i32, %c0_i32_0 : i32, i32
  }
  func.func @transform_2(%arg0: i32) -> (i32, i32) {
    %c0_i32 = arith.constant 0 : i32
    %c0_i32_0 = arith.constant 0 : i32
    %c0_i32_1 = arith.constant 0 : i32
    return %c0_i32, %c0_i32_0 : i32, i32
  }
  func.func @transform_3(%arg0: i32) -> (i32, i32) {
    %c0_i32 = arith.constant 0 : i32
    %c0_i32_0 = arith.constant 0 : i32
    %c0_i32_1 = arith.constant 0 : i32
    return %c0_i32, %c0_i32_0 : i32, i32
  }
  func.func @transform_4(%arg0: i32) -> (i32, i32) {
    %c0_i32 = arith.constant 0 : i32
    %c0_i32_0 = arith.constant 0 : i32
    %c0_i32_1 = arith.constant 0 : i32
    return %c0_i32, %c0_i32_0 : i32, i32
  }
  func.func @transform_5(%arg0: i32) -> (i32, i32) {
    %c0_i32 = arith.constant 0 : i32
    %c0_i32_0 = arith.constant 0 : i32
    %c0_i32_1 = arith.constant 0 : i32
    return %c0_i32, %c0_i32_0 : i32, i32
  }
  func.func @transform_6(%arg0: i32) -> (i32, i32) {
    %c0_i32 = arith.constant 0 : i32
    %c0_i32_0 = arith.constant 0 : i32
    return %arg0, %c0_i32 : i32, i32
  }
}

</mosaic_0001>

<llo_original>
// kernel: tpu_custom_call.1
$region0: #{tpu_custom_call.1}
  #allocation0 [shape = 'u32[]', space=smem, size = 0x4, offset = 0x4, fixed_abs, tag = 'smem constant byte address 0x4 - core index']
  #allocation1 [shape = 'u32[144,128]{1,0:T(1,128)}', space=vmem, size = 0x12000, scoped, tag = 'internal scratch']
  %s0 = inlined_call_operand.vmem [shape: f32[16,1], index: 0, kind: input, shape index: {}]
  %s1 = inlined_call_operand.vmem [shape: f32[1,32], index: 1, kind: input, shape index: {}]
  %s2 = inlined_call_operand.vmem [shape: bf16[32,128], index: 2, kind: input, shape index: {}]
  %s3 = inlined_call_operand.vmem [shape: f32[1,128], index: 3, kind: input, shape index: {}]
  %s4 = inlined_call_operand.hbm [shape: bf16[128,128], index: 4, kind: input, shape index: {}]
  %s5 = inlined_call_operand.vmem [shape: f32[1,128], index: 5, kind: input, shape index: {}]
  %s6 = inlined_call_operand.hbm [shape: f32[16,128], index: 6, kind: output, shape index: {}]
  %s7 = sld [smem:[#allocation0]]
  $region61: #{tpu_custom_call.1} parent=0
    _
  %s9 = ssub.s32 1, %s7
  %s10 = scalar_select 0, %s9, %s7
  $region1: #{tpu_custom_call.1} parent=0
    #allocation2 [shape = 'u8[32768]{0}', space=vmem, size = 0x8000, scoped, tag = 'input window, operand 4, single buffered']
    #allocation3 [shape = 's32[2]{0}', space=sflag, size = 0x8, scoped, tag = 'scoped memory for tpu_custom_call.1']
    #allocation4 [shape = 's32[2]{0}', space=sflag, size = 0x8, scoped, tag = 'scoped memory for tpu_custom_call.1']
    #allocation5 [shape = 'u8[8192]{0}', space=vmem, size = 0x2000, scoped, tag = 'output window, operand 0']
    %11 = vsyncpa [#allocation3], 0
    %12 = vsyncpa [#allocation4], 0
    %s13 = scalar_lea.sflag [#allocation4], 1
    %14 = vsyncpa %s13, 0
    loop: start=0, step=1, limit=4
    $region2: #{tpu_custom_call.1} parent=1 // loop_pre_header
      _
    $region3: #{tpu_custom_call.1} parent=1 // loop_header
      %s16 = sphi 0, %s20
      %p17 = scmp.ge.s32.totalorder %s16, 4
      %s26 = sphi 0, %s28
      %s29 = sphi 0, %s26
      %s30 = sphi 0, %s29
      %s46 = sphi 0, %s30
      %s50 = sphi 0, %s50
      %s52 = sphi 0, %s50
      %s53 = sphi 0, %s52
      %s67 = sphi 0, %s53
      %s71 = sphi 0, %s71
      %s73 = sphi 0, %s71
      %s74 = sphi 0, %s73
      %s88 = sphi 0, %s74
      %s92 = sphi 0, %s92
      %s94 = sphi 0, %s92
      %s95 = sphi 0, %s94
      %s109 = sphi 0, %s95
      %s113 = sphi 0, %s113
      %s115 = sphi 0, %s113
      %s116 = sphi 0, %s115
      %s130 = sphi 0, %s116
      %s134 = sphi 0, %s134
      %s136 = sphi 0, %s134
      %s137 = sphi 0, %s136
      %s151 = sphi 0, %s137
      %s157 = sphi 0, %s159
      %s160 = sphi 0, %s157
      %s161 = sphi 0, %s160
      %s177 = sphi 0, %s161
    $region4: #{tpu_custom_call.1} parent=1 // loop_header_branch
      %19 = sbr.rel (%p17) target = $region8
    $region5: #{tpu_custom_call.1} parent=1 // loop_body
      %s21 = ssub.s32 %s16, 1
      %s22 = ssub.s32 %s16, 2
      %s23 = sadd.s32 %s16, 1
      %s24 = ssub.s32 %s16, %s23
      %p25 = scmp.eq.s32.totalorder %s24, 0
      %s27 = sadd.s32 %s26, 1
      %s28 = scalar_select %p25, %s26, %s27
      %p31 = pneg %p25
      %p32 = scmp.eq.s32.totalorder %s16, 1
      %p33 = por %p31, %p32
      %p34 = scmp.ne.s32.totalorder %s26, %s29
      %p35 = scmp.eq.s32.totalorder %s16, 0
      %p36 = por %p34, %p35
      %p37 = scmp.ne.s32.totalorder %s26, %s29
      %p38 = scmp.eq.s32.totalorder %s21, 1
      %p39 = por %p37, %p38
      %p40 = scmp.ne.s32.totalorder %s29, %s30
      %p41 = scmp.eq.s32.totalorder %s21, 0
      %p42 = por %p40, %p41
      %p43 = scmp.ne.s32.totalorder %s29, %s30
      %p44 = scmp.eq.s32.totalorder %s22, 1
      %p45 = por %p43, %p44
      %p47 = scmp.ne.s32.totalorder %s30, %s46
      %p48 = scmp.eq.s32.totalorder %s22, 0
      %p49 = por %p47, %p48
      %s51 = sadd.s32 %s50, 1
      %p54 = scmp.eq.s32.totalorder %s16, 1
      %p55 = scmp.ne.s32.totalorder %s50, %s52
      %p56 = scmp.eq.s32.totalorder %s16, 0
      %p57 = por %p55, %p56
      %p58 = scmp.ne.s32.totalorder %s50, %s52
      %p59 = scmp.eq.s32.totalorder %s21, 1
      %p60 = por %p58, %p59
      %p61 = scmp.ne.s32.totalorder %s52, %s53
      %p62 = scmp.eq.s32.totalorder %s21, 0
      %p63 = por %p61, %p62
      %p64 = scmp.ne.s32.totalorder %s52, %s53
      %p65 = scmp.eq.s32.totalorder %s22, 1
      %p66 = por %p64, %p65
      %p68 = scmp.ne.s32.totalorder %s53, %s67
      %p69 = scmp.eq.s32.totalorder %s22, 0
      %p70 = por %p68, %p69
      %s72 = sadd.s32 %s71, 1
      %p75 = scmp.eq.s32.totalorder %s16, 1
      %p76 = scmp.ne.s32.totalorder %s71, %s73
      %p77 = scmp.eq.s32.totalorder %s16, 0
      %p78 = por %p76, %p77
      %p79 = scmp.ne.s32.totalorder %s71, %s73
      %p80 = scmp.eq.s32.totalorder %s21, 1
      %p81 = por %p79, %p80
      %p82 = scmp.ne.s32.totalorder %s73, %s74
      %p83 = scmp.eq.s32.totalorder %s21, 0
      %p84 = por %p82, %p83
      %p85 = scmp.ne.s32.totalorder %s73, %s74
      %p86 = scmp.eq.s32.totalorder %s22, 1
      %p87 = por %p85, %p86
      %p89 = scmp.ne.s32.totalorder %s74, %s88
      %p90 = scmp.eq.s32.totalorder %s22, 0
      %p91 = por %p89, %p90
      %s93 = sadd.s32 %s92, 1
      %p96 = scmp.eq.s32.totalorder %s16, 1
      %p97 = scmp.ne.s32.totalorder %s92, %s94
      %p98 = scmp.eq.s32.totalorder %s16, 0
      %p99 = por %p97, %p98
      %p100 = scmp.ne.s32.totalorder %s92, %s94
      %p101 = scmp.eq.s32.totalorder %s21, 1
      %p102 = por %p100, %p101
      %p103 = scmp.ne.s32.totalorder %s94, %s95
      %p104 = scmp.eq.s32.totalorder %s21, 0
      %p105 = por %p103, %p104
      %p106 = scmp.ne.s32.totalorder %s94, %s95
      %p107 = scmp.eq.s32.totalorder %s22, 1
      %p108 = por %p106, %p107
      %p110 = scmp.ne.s32.totalorder %s95, %s109
      %p111 = scmp.eq.s32.totalorder %s22, 0
      %p112 = por %p110, %p111
      %s114 = sadd.s32 %s113, 1
      %p117 = scmp.eq.s32.totalorder %s16, 1
      %p118 = scmp.ne.s32.totalorder %s113, %s115
      %p119 = scmp.eq.s32.totalorder %s16, 0
      %p120 = por %p118, %p119
      %p121 = scmp.ne.s32.totalorder %s113, %s115
      %p122 = scmp.eq.s32.totalorder %s21, 1
      %p123 = por %p121, %p122
      %p124 = scmp.ne.s32.totalorder %s115, %s116
      %p125 = scmp.eq.s32.totalorder %s21, 0
      %p126 = por %p124, %p125
      %p127 = scmp.ne.s32.totalorder %s115, %s116
      %p128 = scmp.eq.s32.totalorder %s22, 1
      %p129 = por %p127, %p128
      %p131 = scmp.ne.s32.totalorder %s116, %s130
      %p132 = scmp.eq.s32.totalorder %s22, 0
      %p133 = por %p131, %p132
      %s135 = sadd.s32 %s134, 1
      %p138 = scmp.eq.s32.totalorder %s16, 1
      %p139 = scmp.ne.s32.totalorder %s134, %s136
      %p140 = scmp.eq.s32.totalorder %s16, 0
      %p141 = por %p139, %p140
      %p142 = scmp.ne.s32.totalorder %s134, %s136
      %p143 = scmp.eq.s32.totalorder %s21, 1
      %p144 = por %p142, %p143
      %p145 = scmp.ne.s32.totalorder %s136, %s137
      %p146 = scmp.eq.s32.totalorder %s21, 0
      %p147 = por %p145, %p146
      %p148 = scmp.ne.s32.totalorder %s136, %s137
      %p149 = scmp.eq.s32.totalorder %s22, 1
      %p150 = por %p148, %p149
      %p152 = scmp.ne.s32.totalorder %s137, %s151
      %p153 = scmp.eq.s32.totalorder %s22, 0
      %p154 = por %p152, %p153
      %s155 = ssub.s32 %s16, %s23
      %p156 = scmp.eq.s32.totalorder %s155, 0
      %s158 = sadd.s32 %s157, 1
      %s159 = scalar_select %p156, %s157, %s158
      %p162 = pneg %p156
      %p163 = scmp.eq.s32.totalorder %s16, 1
      %p164 = por %p162, %p163
      %p165 = scmp.ne.s32.totalorder %s157, %s160
      %p166 = scmp.eq.s32.totalorder %s16, 0
      %p167 = por %p165, %p166
      %p168 = scmp.ne.s32.totalorder %s157, %s160
      %p169 = scmp.eq.s32.totalorder %s21, 1
      %p170 = por %p168, %p169
      %p171 = scmp.ne.s32.totalorder %s160, %s161
      %p172 = scmp.eq.s32.totalorder %s21, 0
      %p173 = por %p171, %p172
      %p174 = scmp.ne.s32.totalorder %s160, %s161
      %p175 = scmp.eq.s32.totalorder %s22, 1
      %p176 = por %p174, %p175
      %p178 = scmp.ne.s32.totalorder %s161, %s177
      %p179 = scmp.eq.s32.totalorder %s22, 0
      %p180 = por %p178, %p179
      %p181 = scmp.le.s32.totalorder 1, %s16
      %p182 = scmp.lt.s32.totalorder %s16, 3
      %p183 = pnand %p181, %p182
      %p184 = pneg %p183
      // Predicated region
      $region9: #{tpu_custom_call.1} parent=5 // pred_check
        _
      $region10: #{tpu_custom_call.1} parent=5 // pred_check_branch
        %186 = sbr.rel (%p183) target = $region12
      $region11: #{tpu_custom_call.1} parent=5 // pred_region
        %s187 = ssub.s32 %s16, 1
        // Predicated region
        $region13: #{tpu_custom_call.1} parent=11 // pred_check
          %p188 = pneg %p63
        $region14: #{tpu_custom_call.1} parent=11 // pred_check_branch
          %190 = sbr.rel (%p188) target = $region16
        $region15: #{tpu_custom_call.1} parent=11 // pred_region
          _
        $region16: #{tpu_custom_call.1} parent=11 // pred_fallthru
          _
        // Predicated region
        $region17: #{tpu_custom_call.1} parent=11 // pred_check
          %p191 = pneg %p84
        $region18: #{tpu_custom_call.1} parent=11 // pred_check_branch
          %193 = sbr.rel (%p191) target = $region20
        $region19: #{tpu_custom_call.1} parent=11 // pred_region
          _
        $region20: #{tpu_custom_call.1} parent=11 // pred_fallthru
          _
        // Predicated region
        $region21: #{tpu_custom_call.1} parent=11 // pred_check
          %p194 = pneg %p105
        $region22: #{tpu_custom_call.1} parent=11 // pred_check_branch
          %196 = sbr.rel (%p194) target = $region24
        $region23: #{tpu_custom_call.1} parent=11 // pred_region
          _
        $region24: #{tpu_custom_call.1} parent=11 // pred_fallthru
          _
        // Predicated region
        $region25: #{tpu_custom_call.1} parent=11 // pred_check
          %p197 = pneg %p126
        $region26: #{tpu_custom_call.1} parent=11 // pred_check_branch
          %199 = sbr.rel (%p197) target = $region28
        $region27: #{tpu_custom_call.1} parent=11 // pred_region
          %s201 = ssub.s32 1024, 1024
          %202 = vsyncadd [#allocation3], %s201
          %s203 = sshll.u32 [#allocation2], 4
          %s204 = int_to_ptr.vmem [resolvable:$true] %s203
          %209 = dma.hbm_to_vmem [thread:$0]  %s4, 1024, %s204, [#allocation3], 64, 64, 4
        $region28: #{tpu_custom_call.1} parent=11 // pred_fallthru
          _
        // Predicated region
        $region29: #{tpu_custom_call.1} parent=11 // pred_check
          %p210 = pneg %p147
        $region30: #{tpu_custom_call.1} parent=11 // pred_check_branch
          %212 = sbr.rel (%p210) target = $region32
        $region31: #{tpu_custom_call.1} parent=11 // pred_region
          _
        $region32: #{tpu_custom_call.1} parent=11 // pred_fallthru
          _
      $region12: #{tpu_custom_call.1} parent=5 // pred_fallthru
        _
      %p213 = scmp.lt.s32.totalorder %s16, 2
      // Predicated region
      $region33: #{tpu_custom_call.1} parent=5 // pred_check
        %p214 = pneg %p213
      $region34: #{tpu_custom_call.1} parent=5 // pred_check_branch
        %216 = sbr.rel (%p214) target = $region36
      $region35: #{tpu_custom_call.1} parent=5 // pred_region
        // Predicated region
        $region37: #{tpu_custom_call.1} parent=35 // pred_check
          %p217 = pneg %p36
        $region38: #{tpu_custom_call.1} parent=35 // pred_check_branch
          %219 = sbr.rel (%p217) target = $region40
        $region39: #{tpu_custom_call.1} parent=35 // pred_region
          %p220 = scmp.lt.s32.totalorder %s16, 1
          %s221 = scalar_select %p220, %s16, 1
          %s222 = smul.addr %s221, 8
          %s223 = scalar_lea.vmem %s0, %s222
        $region40: #{tpu_custom_call.1} parent=35 // pred_fallthru
          _
      $region36: #{tpu_custom_call.1} parent=5 // pred_fallthru
        _
      %p224 = scmp.le.s32.totalorder 1, %s16
      %p225 = scmp.lt.s32.totalorder %s16, 3
      %p226 = pnand %p224, %p225
      %p227 = pneg %p226
      // Predicated region
      $region41: #{tpu_custom_call.1} parent=5 // pred_check
        _
      $region42: #{tpu_custom_call.1} parent=5 // pred_check_branch
        %229 = sbr.rel (%p226) target = $region44
      $region43: #{tpu_custom_call.1} parent=5 // pred_region
        %s230 = ssub.s32 %s16, 1
        // Predicated region
        $region45: #{tpu_custom_call.1} parent=43 // pred_check
          %p231 = pneg %p126
        $region46: #{tpu_custom_call.1} parent=43 // pred_check_branch
          %233 = sbr.rel (%p231) target = $region48
        $region47: #{tpu_custom_call.1} parent=43 // pred_region
          %234 = dma.done [#allocation3], 1024
        $region48: #{tpu_custom_call.1} parent=43 // pred_fallthru
          _
        %p235 = scmp.lt.s32.totalorder %s21, 1
        %s236 = scalar_select %p235, %s21, 1
        %s237 = smul.addr %s236, 8
        %s238 = scalar_lea.vmem %s0, %s237
        %p239 = pneg %p42
        %p240 = pneg %p39
        %p241 = pneg %p63
        %p242 = pneg %p60
        %p243 = pneg %p84
        %p244 = pneg %p81
        %p245 = pneg %p105
        %p246 = pneg %p102
        %p247 = pneg %p126
        %p248 = pneg %p123
        %p249 = pneg %p147
        %p250 = pneg %p144
        %p251 = pneg %p173
        %p252 = pneg %p170
        %s253 = sand.u32 %s160, 1
        %s254 = scalar_lea.sflag [#allocation4], %s253
        %s255 = sand.u32 %s160, 1
        %s256 = smul.addr %s255, 8
        %s257 = scalar_lea.vmem [#allocation5], %s256
        %p258 = scmp.lt.s32.totalorder %s21, 1
        %s259 = scalar_select %p258, %s21, 1
        %s260 = smul.addr %s259, 8
        %s261 = scalar_lea.vmem %s0, %s260
        %v263 = vld [vmem:[%s261] sm:$0xff]
        %v264 = vld [vmem:[%s1] sm:$0x1]
        %266 = vset.pattern.permute.xlu0 0
        %267 = vperm.xlu0 %266, %v263
        %v268 = vpop.permute.xlu0 %267
        %v271 = vlaneseq
        %v272 = vshrl.u32 %v271, 7
        %v273 = vsub.s32 0, %v272
        %v274 = vrot.slane %v264, %v273
        %v276 = vmul.f32 %v268, %v274
        %v277 = vlaneseq
        %v278 = vand.u32 %v277, 127
        %vm279 = vcmp.lt.s32.totalorder %v278, 16
        %v280 = vand.u32 2147483647, %v276
        %vm281 = vcmp.le.f32.partialorder %v280, 0.7853982
        %vm282 = vcmp.lt.s32.totalorder %v276, 0
        %v283 = vand.u32 %v276, 2139095040
        %v284 = vshrl.u32 %v283, 23
        %v285 = vsub.s32 %v284, 127
        %v286 = vand.u32 2147483647, %v276
        %v287 = vand.u32 %v286, 8388607
        %v288 = vor.u32 %v287, 8388608
        %v289 = vsub.s32 0, %v288
        %v290 = vadd.s32 %v285, 1
        %vm291 = vcmp.gt.s32.totalorder %v290, 0
        %v292 = vsel %vm291, %v290, 0
        %v293 = vshrl.u32 %v292, 5
        %v294 = vand.u32 %v292, 31
        %v295 = vsub.s32 32, %v294
        %v296 = vshrl.u32 683565275, %v295
        %v297 = vshll.u32 683565275, %v294
        %v298 = vshrl.u32 2475754826, %v295
        %v299 = vor.u32 %v297, %v298
        %v300 = vshll.u32 2475754826, %v294
        %v301 = vshrl.u32 2131351028, %v295
        %v302 = vor.u32 %v300, %v301
        %v303 = vshll.u32 2131351028, %v294
        %v304 = vshrl.u32 2102212464, %v295
        %v305 = vor.u32 %v303, %v304
        %v306 = vshll.u32 2102212464, %v294
        %v307 = vshrl.u32 920167782, %v295
        %v308 = vor.u32 %v306, %v307
        %v309 = vshll.u32 920167782, %v294
        %v310 = vshrl.u32 1326507024, %v295
        %v311 = vor.u32 %v309, %v310
        %vm312 = vcmp.lt.s32.totalorder %v293, 1
        %vm313 = vcmp.lt.s32.totalorder %v293, 2
        %vm314 = vcmp.lt.s32.totalorder %v293, 3
        %vm315 = vcmp.lt.s32.totalorder %v293, 4
        %v316 = vsel %vm312, %v296, %v299
        %v317 = vsel %vm315, %v305, 2102212464
        %v318 = vsel %vm314, %v302, %v317
        %v319 = vsel %vm313, %v316, %v318
        %v320 = vsel %vm312, %v299, %v302
        %v321 = vsel %vm315, %v308, 920167782
        %v322 = vsel %vm314, %v305, %v321
        %v323 = vsel %vm313, %v320, %v322
        %v324 = vsel %vm312, %v302, %v305
        %v325 = vsel %vm315, %v311, 1326507024
        %v326 = vsel %vm314, %v308, %v325
        %v327 = vsel %vm313, %v324, %v326
        %v328 = vshll.u32 %v288, 8
        %v329 = vmul.u32.u64.compose %v328, %v327
        %v330 = vextract.low.u32 %v329
        %v331 = vextract.high.u32 %v329
        %v332 = vmul.u32.u64.compose %v328, %v323
        %v333 = vextract.low.u32 %v332
        %v334 = vextract.high.u32 %v332
        %v335 = vmul.u32 %v328, %v319
        %v336 = vadd.s32 %v331, %v333
        %vm337 = vc.u32 %v331, %v333
        %v338 = vadd.s32 %v334, 1
        %v339 = vsel %vm337, %v338, %v334
        %v340 = vadd.s32 %v335, %v339
        %v341 = vadd.s32 %v340, 536870912
        %v342 = vshrl.u32 %v341, 30
        %v343 = vshll.u32 %v342, 30
        %v344 = vsub.s32 %v340, %v343
        %vm345 = vcmp.lt.s32.totalorder %v344, 0
        %v346 = vsub.s32 0, %v344
        %v347 = vsel %vm345, %v346, %v344
        %v348 = vclz %v347
        %v349 = vsub.s32 %v348, 2
        %vm350 = vcmp.gt.s32.totalorder 0, %v349
        %v351 = vsel %vm350, 0, %v349
        %v352 = vsub.s32 32, %v351
        %v353 = vshll.u32 %v344, %v351
        %v354 = vshrl.u32 %v336, %v352
        %v355 = vor.u32 %v353, %v354
        %v356 = vsub.s32 4294967266, %v351
        %v357 = vadd.s32 %v356, 127
        %v358 = vshll.u32 %v357, 23
        %v359 = vor.u32 4788187, %v358
        %v360 = vand.u32 2147483647, %v359
        %v362 = vcvt.s32.f32 %v355
        %v363 = vmul.f32 %v362, %v360
        %v364 = vxor.u32 %v363, 2147483648
        %v365 = vsel %vm282, %v364, %v363
        %v366 = vsub.s32 4, %v342
        %v367 = vsel %vm282, %v366, %v342
        %v368 = vsel %vm281, %v276, %v365
        %v369 = vsel %vm281, 0, %v367
        %v370 = vcosq.f32.pop %v368
        %v371 = vsinq.f32.pop %v368
        %vm372 = vweird.f32 %v276
        %v373 = vadd.s32 %v369, 3
        %v374 = vand.u32 %v373, 3
        %vm375 = vcmp.lt.s32.totalorder %v374, 2
        %vm376 = vcmp.eq.s32.totalorder %v374, 0
        %v377 = vxor.u32 %v371, 2147483648
        %v378 = vsel %vm376, %v370, %v377
        %vm379 = vcmp.eq.s32.totalorder %v374, 2
        %v380 = vxor.u32 %v370, 2147483648
        %v381 = vsel %vm379, %v380, %v371
        %v382 = vsel %vm375, %v378, %v381
        %v383 = vsel %vm372, nan, %v382
        %v384 = vand.u32 2147483647, %v276
        %vm385 = vcmp.le.f32.partialorder %v384, 0.7853982
        %vm386 = vcmp.lt.s32.totalorder %v276, 0
        %v387 = vand.u32 %v276, 2139095040
        %v388 = vshrl.u32 %v387, 23
        %v389 = vsub.s32 %v388, 127
        %v390 = vand.u32 2147483647, %v276
        %v391 = vand.u32 %v390, 8388607
        %v392 = vor.u32 %v391, 8388608
        %v393 = vsub.s32 0, %v392
        %v394 = vadd.s32 %v389, 1
        %vm395 = vcmp.gt.s32.totalorder %v394, 0
        %v396 = vsel %vm395, %v394, 0
        %v397 = vshrl.u32 %v396, 5
        %v398 = vand.u32 %v396, 31
        %v399 = vsub.s32 32, %v398
        %v400 = vshrl.u32 683565275, %v399
        %v401 = vshll.u32 683565275, %v398
        %v402 = vshrl.u32 2475754826, %v399
        %v403 = vor.u32 %v401, %v402
        %v404 = vshll.u32 2475754826, %v398
        %v405 = vshrl.u32 2131351028, %v399
        %v406 = vor.u32 %v404, %v405
        %v407 = vshll.u32 2131351028, %v398
        %v408 = vshrl.u32 2102212464, %v399
        %v409 = vor.u32 %v407, %v408
        %v410 = vshll.u32 2102212464, %v398
        %v411 = vshrl.u32 920167782, %v399
        %v412 = vor.u32 %v410, %v411
        %v413 = vshll.u32 920167782, %v398
        %v414 = vshrl.u32 1326507024, %v399
        %v415 = vor.u32 %v413, %v414
        %vm416 = vcmp.lt.s32.totalorder %v397, 1
        %vm417 = vcmp.lt.s32.totalorder %v397, 2
        %vm418 = vcmp.lt.s32.totalorder %v397, 3
        %vm419 = vcmp.lt.s32.totalorder %v397, 4
        %v420 = vsel %vm416, %v400, %v403
        %v421 = vsel %vm419, %v409, 2102212464
        %v422 = vsel %vm418, %v406, %v421
        %v423 = vsel %vm417, %v420, %v422
        %v424 = vsel %vm416, %v403, %v406
        %v425 = vsel %vm419, %v412, 920167782
        %v426 = vsel %vm418, %v409, %v425
        %v427 = vsel %vm417, %v424, %v426
        %v428 = vsel %vm416, %v406, %v409
        %v429 = vsel %vm419, %v415, 1326507024
        %v430 = vsel %vm418, %v412, %v429
        %v431 = vsel %vm417, %v428, %v430
        %v432 = vshll.u32 %v392, 8
        %v433 = vmul.u32.u64.compose %v432, %v431
        %v434 = vextract.low.u32 %v433
        %v435 = vextract.high.u32 %v433
        %v436 = vmul.u32.u64.compose %v432, %v427
        %v437 = vextract.low.u32 %v436
        %v438 = vextract.high.u32 %v436
        %v439 = vmul.u32 %v432, %v423
        %v440 = vadd.s32 %v435, %v437
        %vm441 = vc.u32 %v435, %v437
        %v442 = vadd.s32 %v438, 1
        %v443 = vsel %vm441, %v442, %v438
        %v444 = vadd.s32 %v439, %v443
        %v445 = vadd.s32 %v444, 536870912
        %v446 = vshrl.u32 %v445, 30
        %v447 = vshll.u32 %v446, 30
        %v448 = vsub.s32 %v444, %v447
        %vm449 = vcmp.lt.s32.totalorder %v448, 0
        %v450 = vsub.s32 0, %v448
        %v451 = vsel %vm449, %v450, %v448
        %v452 = vclz %v451
        %v453 = vsub.s32 %v452, 2
        %vm454 = vcmp.gt.s32.totalorder 0, %v453
        %v455 = vsel %vm454, 0, %v453
        %v456 = vsub.s32 32, %v455
        %v457 = vshll.u32 %v448, %v455
        %v458 = vshrl.u32 %v440, %v456
        %v459 = vor.u32 %v457, %v458
        %v460 = vsub.s32 4294967266, %v455
        %v461 = vadd.s32 %v460, 127
        %v462 = vshll.u32 %v461, 23
        %v463 = vor.u32 4788187, %v462
        %v464 = vand.u32 2147483647, %v463
        %v466 = vcvt.s32.f32 %v459
        %v467 = vmul.f32 %v466, %v464
        %v468 = vxor.u32 %v467, 2147483648
        %v469 = vsel %vm386, %v468, %v467
        %v470 = vsub.s32 4, %v446
        %v471 = vsel %vm386, %v470, %v446
        %v472 = vsel %vm385, %v276, %v469
        %v473 = vsel %vm385, 0, %v471
        %v474 = vcosq.f32.pop %v472
        %v475 = vsinq.f32.pop %v472
        %vm476 = vweird.f32 %v276
        %v477 = vand.u32 %v473, 3
        %vm478 = vcmp.lt.s32.totalorder %v477, 2
        %vm479 = vcmp.eq.s32.totalorder %v477, 0
        %v480 = vxor.u32 %v475, 2147483648
        %v481 = vsel %vm479, %v474, %v480
        %vm482 = vcmp.eq.s32.totalorder %v477, 2
        %v483 = vxor.u32 %v474, 2147483648
        %v484 = vsel %vm482, %v483, %v475
        %v485 = vsel %vm478, %v481, %v484
        %v486 = vsel %vm476, nan, %v485
        %v487 = vsel %vm279, 1, 0
        %vm488 = vcmp.eq.s32.totalorder %v487, 1
        %v489 = vsel %vm488, %v383, %v486
        %v490 = vpack.c.bf16 %v489, %v489
        %v491 = vld [vmem:[%s2] sm:$0xf]
        %v492 = vld [vmem:[%s2 + $0x4] sm:$0xf]
        %v493 = vld [vmem:[%s2 + $0x8] sm:$0xf]
        %v494 = vld [vmem:[%s2 + $0xc] sm:$0xf]
        %v495 = vld [vmem:[%s3] sm:$0x1]
        %v497 = vlaneseq
        %v498 = vshrl.u32 %v497, 7
        %v499 = vsub.s32 0, %v498
        %v500 = vrot.slane %v495, %v499
        %v506 = vunpack.c.l.b16 %v491
        %v507 = vunpack.c.l.b16 %v492
        %v508 = vunpack.c.l.b16 %v493
        %v509 = vunpack.c.l.b16 %v494
        %v510 = vpack.c.b16 %v507, %v506
        %v511 = vpack.c.b16 %v509, %v508
        %vm514 = vcmask 261120
        %v516 = vsel %vm514, %v490, 0
        %518 = vmatprep.subr.bf16.mxu0 0
        %519 = vmatpush1.bf16.msra.mxu0 0
        %520 = vmatprep.subr.bf16.mxu0 0
        %521 = vmatpush1.bf16.msra.mxu0 0
        %522 = vmatprep.subr.bf16.mxu0 0
        %523 = vmatpush1.bf16.msra.mxu0 0
        %524 = vmatprep.subr.bf16.mxu0 0
        %525 = vmatpush1.bf16.msra.mxu0 0
        %526 = vmatprep.subr.bf16.mxu0 0
        %527 = vmatpush1.bf16.msra.mxu0 0
        %528 = vmatprep.subr.bf16.mxu0 0
        %529 = vmatpush1.bf16.msra.mxu0 0
        %530 = vmatprep.subr.bf16.mxu0 0
        %531 = vmatpush1.bf16.msra.mxu0 %v511
        %532 = vmatprep.subr.bf16.mxu0 0
        %533 = vmatpush1.bf16.msra.mxu0 %v510
        %534 = vmatprep.subr.bf16.mxu0 0
        %535 = vmatpush2.bf16.msra.mxu0 0
        %536 = vmatprep.subr.bf16.mxu0 0
        %537 = vmatpush2.bf16.msra.mxu0 0
        %538 = vmatprep.subr.bf16.mxu0 0
        %539 = vmatpush2.bf16.msra.mxu0 0
        %540 = vmatprep.subr.bf16.mxu0 0
        %541 = vmatpush2.bf16.msra.mxu0 0
        %542 = vmatprep.subr.bf16.mxu0 0
        %543 = vmatpush2.bf16.msra.mxu0 0
        %544 = vmatprep.subr.bf16.mxu0 0
        %545 = vmatpush2.bf16.msra.mxu0 0
        %546 = vmatprep.subr.bf16.mxu0 0
        %547 = vmatpush2.bf16.msra.mxu0 0
        %548 = vmatprep.subr.bf16.mxu0 0
        %549 = vmatpush2.bf16.msra.mxu0 0
        %550 = vmatprep.mubr.bf16.mxu0 0
        %551 = vmatmul.mubr.bf16.gmra.mxu0 %v516
        %v552 = vpop.f32.mrf.mxu0
        %v553 = vadd.f32 %v500, %v552
        %v554 = vpop.f32.mrf.mxu0
        %v555 = vpop.f32.mrf.mxu0
        %v556 = vpop.f32.mrf.mxu0
        %557 = vdwg.mxu0
        %v558 = vsub.f32 0.0, %v553
        %v559 = vmul.f32 %v558, 1.442695
        %v560 = vpow.pop %v559
        %v561 = vadd.f32 %v560, 1.0
        %v562 = vrcp.pop %v561
        %v563 = vmul.f32 %v553, %v562
        %v564 = vpack.c.bf16 %v563, %v563
        %v565 = vld [vmem:[#allocation2] sm:$0xf]
        %v566 = vld [vmem:[#allocation2 + $0x4] sm:$0xf]
        %v567 = vld [vmem:[#allocation2 + $0x8] sm:$0xf]
        %v568 = vld [vmem:[#allocation2 + $0xc] sm:$0xf]
        %v569 = vld [vmem:[#allocation2 + $0x10] sm:$0xf]
        %v570 = vld [vmem:[#allocation2 + $0x14] sm:$0xf]
        %v571 = vld [vmem:[#allocation2 + $0x18] sm:$0xf]
        %v572 = vld [vmem:[#allocation2 + $0x1c] sm:$0xf]
        %v573 = vld [vmem:[#allocation2 + $0x20] sm:$0xf]
        %v574 = vld [vmem:[#allocation2 + $0x24] sm:$0xf]
        %v575 = vld [vmem:[#allocation2 + $0x28] sm:$0xf]
        %v576 = vld [vmem:[#allocation2 + $0x2c] sm:$0xf]
        %v577 = vld [vmem:[#allocation2 + $0x30] sm:$0xf]
        %v578 = vld [vmem:[#allocation2 + $0x34] sm:$0xf]
        %v579 = vld [vmem:[#allocation2 + $0x38] sm:$0xf]
        %v580 = vld [vmem:[#allocation2 + $0x3c] sm:$0xf]
        %v581 = vld [vmem:[%s5] sm:$0x1]
        %v583 = vlaneseq
        %v584 = vshrl.u32 %v583, 7
        %v585 = vsub.s32 0, %v584
        %v586 = vrot.slane %v581, %v585
        %v604 = vunpack.c.l.b16 %v565
        %v605 = vunpack.c.l.b16 %v566
        %v606 = vunpack.c.l.b16 %v567
        %v607 = vunpack.c.l.b16 %v568
        %v608 = vunpack.c.l.b16 %v569
        %v609 = vunpack.c.l.b16 %v570
        %v610 = vunpack.c.l.b16 %v571
        %v611 = vunpack.c.l.b16 %v572
        %v612 = vunpack.c.l.b16 %v573
        %v613 = vunpack.c.l.b16 %v574
        %v614 = vunpack.c.l.b16 %v575
        %v615 = vunpack.c.l.b16 %v576
        %v616 = vunpack.c.l.b16 %v577
        %v617 = vunpack.c.l.b16 %v578
        %v618 = vunpack.c.l.b16 %v579
        %v619 = vunpack.c.l.b16 %v580
        %v620 = vpack.c.b16 %v605, %v604
        %v621 = vpack.c.b16 %v607, %v606
        %v622 = vpack.c.b16 %v609, %v608
        %v623 = vpack.c.b16 %v611, %v610
        %v624 = vpack.c.b16 %v613, %v612
        %v625 = vpack.c.b16 %v615, %v614
        %v626 = vpack.c.b16 %v617, %v616
        %v627 = vpack.c.b16 %v619, %v618
        %636 = vmatprep.subr.bf16.mxu0 0
        %637 = vmatpush1.bf16.msra.mxu0 %v627
        %638 = vmatprep.subr.bf16.mxu0 0
        %639 = vmatpush1.bf16.msra.mxu0 %v626
        %640 = vmatprep.subr.bf16.mxu0 0
        %641 = vmatpush1.bf16.msra.mxu0 %v625
        %642 = vmatprep.subr.bf16.mxu0 0
        %643 = vmatpush1.bf16.msra.mxu0 %v624
        %644 = vmatprep.subr.bf16.mxu0 0
        %645 = vmatpush1.bf16.msra.mxu0 %v623
        %646 = vmatprep.subr.bf16.mxu0 0
        %647 = vmatpush1.bf16.msra.mxu0 %v622
        %648 = vmatprep.subr.bf16.mxu0 0
        %649 = vmatpush1.bf16.msra.mxu0 %v621
        %650 = vmatprep.subr.bf16.mxu0 0
        %651 = vmatpush1.bf16.msra.mxu0 %v620
        %652 = vmatprep.subr.bf16.mxu0 0
        %653 = vmatpush2.bf16.msra.mxu0 0
        %654 = vmatprep.subr.bf16.mxu0 0
        %655 = vmatpush2.bf16.msra.mxu0 0
        %656 = vmatprep.subr.bf16.mxu0 0
        %657 = vmatpush2.bf16.msra.mxu0 0
        %658 = vmatprep.subr.bf16.mxu0 0
        %659 = vmatpush2.bf16.msra.mxu0 0
        %660 = vmatprep.subr.bf16.mxu0 0
        %661 = vmatpush2.bf16.msra.mxu0 0
        %662 = vmatprep.subr.bf16.mxu0 0
        %663 = vmatpush2.bf16.msra.mxu0 0
        %664 = vmatprep.subr.bf16.mxu0 0
        %665 = vmatpush2.bf16.msra.mxu0 0
        %666 = vmatprep.subr.bf16.mxu0 0
        %667 = vmatpush2.bf16.msra.mxu0 0
        %668 = vmatprep.mubr.bf16.mxu0 0
        %669 = vmatmul.mubr.bf16.gmra.mxu0 %v564
        %v670 = vpop.f32.mrf.mxu0
        %v671 = vadd.f32 %v586, %v670
        %v672 = vpop.f32.mrf.mxu0
        %v673 = vpop.f32.mrf.mxu0
        %v674 = vpop.f32.mrf.mxu0
        %675 = vdwg.mxu0
        %v676 = vsub.f32 0.0, %v671
        %v677 = vmul.f32 %v676, 1.442695
        %v678 = vpow.pop %v677
        %v679 = vadd.f32 %v678, 1.0
        %v680 = vrcp.pop %v679
        %v681 = vmul.f32 %v671, %v680
        %682 = vst [vmem:[%s257] sm:$0xff] %v681
        %s683 = sand.u32 %s160, 1
        %s684 = scalar_lea.sflag [#allocation4], %s683
        %s685 = sand.u32 %s160, 1
        %s686 = smul.addr %s685, 8
        %s687 = scalar_lea.vmem [#allocation5], %s686
        // Predicated region
        $region49: #{tpu_custom_call.1} parent=43 // pred_check
          %p688 = pneg %p170
        $region50: #{tpu_custom_call.1} parent=43 // pred_check_branch
          %690 = sbr.rel (%p688) target = $region52
        $region51: #{tpu_custom_call.1} parent=43 // pred_region
          %s692 = ssub.s32 128, 128
          %693 = vsyncadd %s684, %s692
          %s694 = smul.addr %s21, 128
          %s695 = scalar_lea.hbm %s6, %s694
          %s697 = sshll.u32 %s687, 4
          %s698 = int_to_ptr.vmem [resolvable:$true] %s697
          %700 = dma.vmem_to_hbm [thread:$0]  %s698, 128, %s695, %s684
        $region52: #{tpu_custom_call.1} parent=43 // pred_fallthru
          _
      $region44: #{tpu_custom_call.1} parent=5 // pred_fallthru
        _
      %p701 = scmp.le.s32.totalorder 2, %s16
      // Predicated region
      $region53: #{tpu_custom_call.1} parent=5 // pred_check
        %p702 = pneg %p701
      $region54: #{tpu_custom_call.1} parent=5 // pred_check_branch
        %704 = sbr.rel (%p702) target = $region56
      $region55: #{tpu_custom_call.1} parent=5 // pred_region
        %s705 = ssub.s32 %s16, 2
        // Predicated region
        $region57: #{tpu_custom_call.1} parent=55 // pred_check
          %p706 = pneg %p176
        $region58: #{tpu_custom_call.1} parent=55 // pred_check_branch
          %708 = sbr.rel (%p706) target = $region60
        $region59: #{tpu_custom_call.1} parent=55 // pred_region
          %s709 = sand.u32 %s161, 1
          %s710 = scalar_lea.sflag [#allocation4], %s709
          %s711 = sand.u32 %s161, 1
          %s712 = smul.addr %s711, 8
          %s713 = scalar_lea.vmem [#allocation5], %s712
          %714 = dma.done %s710, 128
        $region60: #{tpu_custom_call.1} parent=55 // pred_fallthru
          _
      $region56: #{tpu_custom_call.1} parent=5 // pred_fallthru
        _
    $region6: #{tpu_custom_call.1} parent=1 // loop_footer
      %s20 = sadd.s32 1, %s16
    $region7: #{tpu_custom_call.1} parent=1 // loop_footer_branch
      %15 = sbr.rel target = $region3
    $region8: #{tpu_custom_call.1} parent=1 // loop_exit
      _
    %715 = vsyncpa [#allocation3], 1
    %s716 = scalar_lea.sflag [#allocation3], 1
    %717 = vsyncpa %s716, 1
    %718 = vsyncpa [#allocation4], 1
    %s719 = scalar_lea.sflag [#allocation4], 1
    %720 = vsyncpa %s719, 1

</llo_original>
